<compile_context>
chip_gen: v6e
topology: v6e:2x2x1
jax: 0.10.0
libtpu: 0.0.40
codegen_flags: <defaults>
</compile_context>

<pallas_src>
import functools

import jax
import jax.numpy as jnp
from jax.experimental import pallas as pl
from jax.experimental.pallas import tpu as pltpu

LANE = 128


def _round_up(x, m):
    return (x + m - 1) // m * m


# ----------------------------- Pallas kernel ------------------------------

def fused_conv_pool_fc_kernel(p_ref, cw_ref, cb_ref, fw_ref, fb_ref, o_ref, *, hw):
    """One grid step == one sample: conv(matmul)+ReLU -> avg-pool -> classifier.

    p_ref  : [HW, K_pad]      bf16  im2col patches for this sample
    cw_ref : [K_pad, C_pad]   bf16  conv weights (im2col layout, zero padded)
    cb_ref : [1, C_pad]       f32   conv bias (zero padded)
    fw_ref : [C_pad, CLS_pad] f32   classifier weights (zero padded)
    fb_ref : [1, CLS_pad]     f32   classifier bias (zero padded)
    o_ref  : [1, 1, CLS_pad]  f32   logits row for this sample (lane-dense)
    """
    # forward_features: 3x3 conv as one full-width MXU matmul, f32 accumulate.
    feat = jnp.dot(p_ref[...], cw_ref[...], preferred_element_type=jnp.float32)
    feat = jnp.maximum(feat + cb_ref[...], 0.0)                      # [HW, C_pad]

    # forward_head (pre_logits): global average pool as a ones-row MXU matmul
    # (keeps the HW-deep reduction off the XLU).
    pool_w = jnp.full((1, hw), 1.0 / hw, dtype=jnp.float32)
    pooled = jnp.dot(pool_w, feat, preferred_element_type=jnp.float32)   # [1, C_pad]

    # get_classifier(): linear layer, f32 throughout.
    logits = jnp.dot(pooled, fw_ref[...], preferred_element_type=jnp.float32)
    logits = logits + fb_ref[...]                                    # [1, CLS_pad]
    o_ref[...] = logits[None].astype(o_ref.dtype)                    # [1,1,CLS_pad]


# ------------------------------ JAX glue ----------------------------------

def _im2col_nhwc(x_nhwc, kh=3, kw=3):
    """Extract 3x3 patches with pad=1, stride=1. Returns [N*H*W, kh*kw*C]."""
    n, h, w, c = x_nhwc.shape
    xp = jnp.pad(x_nhwc, ((0, 0), (1, 1), (1, 1), (0, 0)))
    cols = []
    for dh in range(kh):
        for dw in range(kw):
            cols.append(xp[:, dh:dh + h, dw:dw + w, :])      # [N,H,W,C]
    patches = jnp.stack(cols, axis=-2)                       # [N,H,W,kh*kw,C]
    return patches.reshape(n * h * w, kh * kw * c)


def model_wrapper_forward(x_nchw, params):
    """Equivalent of ModelWrapper.forward(x): features -> head -> logits."""
    n, c_in, h, w = x_nchw.shape
    hw = h * w
    conv_w = params["conv_w"]          # [C_feat, C_in, 3, 3] (torch OIHW)
    conv_b = params["conv_b"]          # [C_feat]
    fc_w = params["fc_w"]              # [num_classes, C_feat]
    fc_b = params["fc_b"]              # [num_classes]
    c_feat = conv_w.shape[0]
    num_classes = fc_w.shape[0]

    k = 9 * c_in
    k_pad = _round_up(k, LANE)
    c_pad = _round_up(c_feat, LANE)
    cls_pad = _round_up(num_classes, LANE)

    # --- input prep: im2col, pad K to 128, cast operands to bf16 -----------
    x_nhwc = jnp.transpose(x_nchw, (0, 2, 3, 1))                     # NCHW->NHWC
    patches = _im2col_nhwc(x_nhwc)                                   # [N*HW, 9*C_in]
    patches = jnp.pad(patches, ((0, 0), (0, k_pad - k))).astype(jnp.bfloat16)

    # --- weight prep (compile-time constants under jit) --------------------
    # conv weight -> im2col matrix; column order (kh, kw, c_in) matches patches.
    w_mat = jnp.transpose(conv_w, (2, 3, 1, 0)).reshape(k, c_feat)
    w_mat = jnp.pad(w_mat, ((0, k_pad - k), (0, c_pad - c_feat))).astype(jnp.bfloat16)
    cb_row = jnp.pad(conv_b.reshape(1, c_feat),
                     ((0, 0), (0, c_pad - c_feat))).astype(jnp.float32)
    fw_mat = jnp.pad(jnp.transpose(fc_w, (1, 0)),
                     ((0, c_pad - c_feat), (0, cls_pad - num_classes))
                     ).astype(jnp.float32)
    fb_row = jnp.pad(fc_b.reshape(1, num_classes),
                     ((0, 0), (0, cls_pad - num_classes))).astype(jnp.float32)

    kernel = functools.partial(fused_conv_pool_fc_kernel, hw=hw)

    logits_pad = pl.pallas_call(
        kernel,
        out_shape=jax.ShapeDtypeStruct((n, 1, cls_pad), jnp.float32),
        grid=(n,),
        in_specs=[
            pl.BlockSpec((hw, k_pad), lambda i: (i, 0)),       # per-sample patches
            pl.BlockSpec((k_pad, c_pad), lambda i: (0, 0)),    # conv weights (resident)
            pl.BlockSpec((1, c_pad), lambda i: (0, 0)),        # conv bias
            pl.BlockSpec((c_pad, cls_pad), lambda i: (0, 0)),  # fc weights
            pl.BlockSpec((1, cls_pad), lambda i: (0, 0)),      # fc bias
        ],
        out_specs=pl.BlockSpec((1, 1, cls_pad), lambda i: (i, 0, 0)),
        compiler_params=pltpu.CompilerParams(
            dimension_semantics=("parallel",)),
    )(patches, w_mat, cb_row, fw_mat, fb_row)

    return logits_pad[:, 0, :num_classes]                            # [N, classes]


def _reference_forward(x_nchw, params):
    """Pure-JAX reference for correctness check."""
    conv_out = jax.lax.conv_general_dilated(
        x_nchw, params["conv_w"], window_strides=(1, 1), padding="SAME",
        dimension_numbers=("NCHW", "OIHW", "NCHW"))
    conv_out = jnp.maximum(conv_out + params["conv_b"][None, :, None, None], 0.0)
    pooled = jnp.mean(conv_out, axis=(2, 3))                         # [N, C_feat]
    return pooled @ params["fc_w"].T + params["fc_b"]


# ------------------------------- main --------------------------------------

if __name__ == "__main__":
    key = jax.random.PRNGKey(0)
    k_x, k_cw, k_cb, k_fw, k_fb = jax.random.split(key, 5)

    N, C_IN, H, W = 2, 4, 16, 16
    C_FEAT, NUM_CLASSES = 32, 10

    x = jax.random.normal(k_x, (N, C_IN, H, W), dtype=jnp.float32)
    params = {
        "conv_w": 0.1 * jax.random.normal(k_cw, (C_FEAT, C_IN, 3, 3), jnp.float32),
        "conv_b": 0.1 * jax.random.normal(k_cb, (C_FEAT,), jnp.float32),
        "fc_w": 0.1 * jax.random.normal(k_fw, (NUM_CLASSES, C_FEAT), jnp.float32),
        "fc_b": 0.1 * jax.random.normal(k_fb, (NUM_CLASSES,), jnp.float32),
    }

    out = model_wrapper_forward(x, params)
    out = jax.block_until_ready(out)

    ref = jax.block_until_ready(_reference_forward(x, params))
    assert out.shape == (N, NUM_CLASSES)
    assert jnp.allclose(out, ref, rtol=1e-2, atol=1e-2), "mismatch vs reference"

    print("KERNEL_OK")
</pallas_src>

<mosaic_0001>
module attributes {stable_mosaic.version = 11 : i64} {
  func.func @fused_conv_pool_fc_kernel(%arg0: i32, %arg1: memref<256x128xbf16, #tpu.memory_space<vmem>>, %arg2: memref<128x128xbf16, #tpu.memory_space<vmem>>, %arg3: memref<1x128xf32, #tpu.memory_space<vmem>>, %arg4: memref<128x128xf32, #tpu.memory_space<vmem>>, %arg5: memref<1x128xf32, #tpu.memory_space<vmem>>, %arg6: memref<1x1x128xf32, #tpu.memory_space<vmem>>) attributes {dimension_semantics = [#tpu.dimension_semantics<parallel>], iteration_bounds = array<i64: 2>, scalar_prefetch = 0 : i64, scratch_operands = 0 : i64, tpu.core_type = #tpu.core_type<tc>, window_params = [{transform_indices = @transform_0, window_bounds = array<i64: 256, 128>}, {pipeline_mode = #tpu.pipeline_mode<synchronous>, transform_indices = @transform_1, window_bounds = array<i64: 128, 128>}, {pipeline_mode = #tpu.pipeline_mode<synchronous>, transform_indices = @transform_2, window_bounds = array<i64: 1, 128>}, {pipeline_mode = #tpu.pipeline_mode<synchronous>, transform_indices = @transform_3, window_bounds = array<i64: 128, 128>}, {pipeline_mode = #tpu.pipeline_mode<synchronous>, transform_indices = @transform_4, window_bounds = array<i64: 1, 128>}, {transform_indices = @transform_5, window_bounds = array<i64: 1, 1, 128>}]} {
    %c0 = arith.constant 0 : index
    %c0_0 = arith.constant 0 : index
    %0 = vector.load %arg1[%c0, %c0_0] : memref<256x128xbf16, #tpu.memory_space<vmem>>, vector<256x128xbf16>
    %c0_1 = arith.constant 0 : index
    %c0_2 = arith.constant 0 : index
    %1 = vector.load %arg2[%c0_1, %c0_2] : memref<128x128xbf16, #tpu.memory_space<vmem>>, vector<128x128xbf16>
    %cst = arith.constant dense<0.000000e+00> : vector<256x128xf32>
    %2 = tpu.matmul %0, %1, %cst {dimension_numbers = #tpu.dot_dimension_numbers<[1], [0], [0], [1], [0, 0, 1, 1], [], []>} : vector<256x128xbf16>, vector<128x128xbf16>, vector<256x128xf32> -> vector<256x128xf32>
    %c0_3 = arith.constant 0 : index
    %c0_4 = arith.constant 0 : index
    %3 = vector.load %arg3[%c0_3, %c0_4] : memref<1x128xf32, #tpu.memory_space<vmem>>, vector<1x128xf32>
    %4 = vector.broadcast %3 : vector<1x128xf32> to vector<256x128xf32>
    %5 = arith.addf %2, %4 : vector<256x128xf32>
    %cst_5 = arith.constant 0.000000e+00 : f32
    %6 = vector.broadcast %cst_5 : f32 to vector<256x128xf32>
    %7 = arith.maximumf %5, %6 : vector<256x128xf32>
    %cst_6 = arith.constant 3.906250e-03 : f32
    %8 = vector.broadcast %cst_6 : f32 to vector<1x256xf32>
    %cst_7 = arith.constant dense<0.000000e+00> : vector<1x128xf32>
    %9 = tpu.matmul %8, %7, %cst_7 {dimension_numbers = #tpu.dot_dimension_numbers<[1], [0], [0], [1], [0, 0, 1, 1], [], []>} : vector<1x256xf32>, vector<256x128xf32>, vector<1x128xf32> -> vector<1x128xf32>
    %c0_8 = arith.constant 0 : index
    %c0_9 = arith.constant 0 : index
    %10 = vector.load %arg4[%c0_8, %c0_9] : memref<128x128xf32, #tpu.memory_space<vmem>>, vector<128x128xf32>
    %cst_10 = arith.constant dense<0.000000e+00> : vector<1x128xf32>
    %11 = tpu.matmul %9, %10, %cst_10 {dimension_numbers = #tpu.dot_dimension_numbers<[1], [0], [0], [1], [0, 0, 1, 1], [], []>} : vector<1x128xf32>, vector<128x128xf32>, vector<1x128xf32> -> vector<1x128xf32>
    %c0_11 = arith.constant 0 : index
    %c0_12 = arith.constant 0 : index
    %12 = vector.load %arg5[%c0_11, %c0_12] : memref<1x128xf32, #tpu.memory_space<vmem>>, vector<1x128xf32>
    %13 = arith.addf %11, %12 : vector<1x128xf32>
    %14 = vector.shape_cast %13 : vector<1x128xf32> to vector<1x1x128xf32>
    %c0_13 = arith.constant 0 : index
    %c0_14 = arith.constant 0 : index
    %c0_15 = arith.constant 0 : index
    %15 = vector.load %arg6[%c0_13, %c0_14, %c0_15] : memref<1x1x128xf32, #tpu.memory_space<vmem>>, vector<1x1x128xf32>
    tpu.vector_store %arg6[%c0_13, %c0_14, %c0_15], %14 {strides = array<i32>} : memref<1x1x128xf32, #tpu.memory_space<vmem>>, vector<1x1x128xf32>,
    return
  }
  func.func @transform_0(%arg0: i32) -> (i32, i32) {
    %c0_i32 = arith.constant 0 : i32
    %c0_i32_0 = arith.constant 0 : i32
    return %arg0, %c0_i32 : i32, i32
  }
  func.func @transform_1(%arg0: i32) -> (i32, i32) {
    %c0_i32 = arith.constant 0 : i32
    %c0_i32_0 = arith.constant 0 : i32
    %c0_i32_1 = arith.constant 0 : i32
    return %c0_i32, %c0_i32_0 : i32, i32
  }
  func.func @transform_2(%arg0: i32) -> (i32, i32) {
    %c0_i32 = arith.constant 0 : i32
    %c0_i32_0 = arith.constant 0 : i32
    %c0_i32_1 = arith.constant 0 : i32
    return %c0_i32, %c0_i32_0 : i32, i32
  }
  func.func @transform_3(%arg0: i32) -> (i32, i32) {
    %c0_i32 = arith.constant 0 : i32
    %c0_i32_0 = arith.constant 0 : i32
    %c0_i32_1 = arith.constant 0 : i32
    return %c0_i32, %c0_i32_0 : i32, i32
  }
  func.func @transform_4(%arg0: i32) -> (i32, i32) {
    %c0_i32 = arith.constant 0 : i32
    %c0_i32_0 = arith.constant 0 : i32
    %c0_i32_1 = arith.constant 0 : i32
    return %c0_i32, %c0_i32_0 : i32, i32
  }
  func.func @transform_5(%arg0: i32) -> (i32, i32, i32) {
    %c0_i32 = arith.constant 0 : i32
    %c0_i32_0 = arith.constant 0 : i32
    %c0_i32_1 = arith.constant 0 : i32
    return %arg0, %c0_i32, %c0_i32_0 : i32, i32, i32
  }
}

</mosaic_0001>

<llo_original>
// kernel: tpu_custom_call.1
$region0: #{tpu_custom_call.1}
  #allocation0 [shape = 'u32[]', space=smem, size = 0x4, offset = 0x4, fixed_abs, tag = 'smem constant byte address 0x4 - core index']
  #allocation1 [shape = 'u32[144,128]{1,0:T(1,128)}', space=vmem, size = 0x12000, scoped, tag = 'internal scratch']
  %s0 = inlined_call_operand.hbm [shape: bf16[512,128], index: 0, kind: input, shape index: {}]
  %s1 = inlined_call_operand.hbm [shape: bf16[128,128], index: 1, kind: input, shape index: {}]
  %s2 = inlined_call_operand.vmem [shape: f32[1,128], index: 2, kind: input, shape index: {}]
  %s3 = inlined_call_operand.hbm [shape: f32[128,128], index: 3, kind: input, shape index: {}]
  %s4 = inlined_call_operand.vmem [shape: f32[1,128], index: 4, kind: input, shape index: {}]
  %s5 = inlined_call_operand.hbm [shape: f32[2,1,128], index: 5, kind: output, shape index: {}]
  %s6 = sld [smem:[#allocation0]]
  $region65: #{tpu_custom_call.1} parent=0
    _
  %s8 = ssub.s32 1, %s6
  %s9 = scalar_select 0, %s8, %s6
  $region1: #{tpu_custom_call.1} parent=0
    #allocation2 [shape = 'u8[131072]{0}', space=vmem, size = 0x20000, scoped, tag = 'input window, operand 0']
    #allocation3 [shape = 's32[2]{0}', space=sflag, size = 0x8, scoped, tag = 'scoped memory for tpu_custom_call.1']
    #allocation4 [shape = 's32[2]{0}', space=sflag, size = 0x8, scoped, tag = 'scoped memory for tpu_custom_call.1']
    #allocation5 [shape = 'u8[32768]{0}', space=vmem, size = 0x8000, scoped, tag = 'input window, operand 1, single buffered']
    #allocation6 [shape = 's32[1]{0}', space=sflag, size = 0x4, scoped, tag = 'scoped memory for tpu_custom_call.1']
    #allocation7 [shape = 'u8[65536]{0}', space=vmem, size = 0x10000, scoped, tag = 'input window, operand 3, single buffered']
    #allocation8 [shape = 'u8[1024]{0}', space=vmem, size = 0x400, scoped, tag = 'output window, operand 0']
    %10 = vsyncpa [#allocation3], 0
    %s11 = scalar_lea.sflag [#allocation3], 1
    %12 = vsyncpa %s11, 0
    %13 = vsyncpa [#allocation6], 0
    %14 = vsyncpa [#allocation4], 0
    %s15 = scalar_lea.sflag [#allocation4], 1
    %16 = vsyncpa %s15, 0
    loop: start=0, step=1, limit=4
    $region2: #{tpu_custom_call.1} parent=1 // loop_pre_header
      _
    $region3: #{tpu_custom_call.1} parent=1 // loop_header
      %s18 = sphi 0, %s22
      %p19 = scmp.ge.s32.totalorder %s18, 4
      %s28 = sphi 0, %s30
      %s31 = sphi 0, %s28
      %s32 = sphi 0, %s31
      %s48 = sphi 0, %s32
      %s52 = sphi 0, %s52
      %s54 = sphi 0, %s52
      %s55 = sphi 0, %s54
      %s69 = sphi 0, %s55
      %s73 = sphi 0, %s73
      %s75 = sphi 0, %s73
      %s76 = sphi 0, %s75
      %s90 = sphi 0, %s76
      %s94 = sphi 0, %s94
      %s96 = sphi 0, %s94
      %s97 = sphi 0, %s96
      %s111 = sphi 0, %s97
      %s115 = sphi 0, %s115
      %s117 = sphi 0, %s115
      %s118 = sphi 0, %s117
      %s132 = sphi 0, %s118
      %s138 = sphi 0, %s140
      %s141 = sphi 0, %s138
      %s142 = sphi 0, %s141
      %s158 = sphi 0, %s142
    $region4: #{tpu_custom_call.1} parent=1 // loop_header_branch
      %21 = sbr.rel (%p19) target = $region8
    $region5: #{tpu_custom_call.1} parent=1 // loop_body
      %s23 = ssub.s32 %s18, 1
      %s24 = ssub.s32 %s18, 2
      %s25 = sadd.s32 %s18, 1
      %s26 = ssub.s32 %s18, %s25
      %p27 = scmp.eq.s32.totalorder %s26, 0
      %s29 = sadd.s32 %s28, 1
      %s30 = scalar_select %p27, %s28, %s29
      %p33 = pneg %p27
      %p34 = scmp.eq.s32.totalorder %s18, 1
      %p35 = por %p33, %p34
      %p36 = scmp.ne.s32.totalorder %s28, %s31
      %p37 = scmp.eq.s32.totalorder %s18, 0
      %p38 = por %p36, %p37
      %p39 = scmp.ne.s32.totalorder %s28, %s31
      %p40 = scmp.eq.s32.totalorder %s23, 1
      %p41 = por %p39, %p40
      %p42 = scmp.ne.s32.totalorder %s31, %s32
      %p43 = scmp.eq.s32.totalorder %s23, 0
      %p44 = por %p42, %p43
      %p45 = scmp.ne.s32.totalorder %s31, %s32
      %p46 = scmp.eq.s32.totalorder %s24, 1
      %p47 = por %p45, %p46
      %p49 = scmp.ne.s32.totalorder %s32, %s48
      %p50 = scmp.eq.s32.totalorder %s24, 0
      %p51 = por %p49, %p50
      %s53 = sadd.s32 %s52, 1
      %p56 = scmp.eq.s32.totalorder %s18, 1
      %p57 = scmp.ne.s32.totalorder %s52, %s54
      %p58 = scmp.eq.s32.totalorder %s18, 0
      %p59 = por %p57, %p58
      %p60 = scmp.ne.s32.totalorder %s52, %s54
      %p61 = scmp.eq.s32.totalorder %s23, 1
      %p62 = por %p60, %p61
      %p63 = scmp.ne.s32.totalorder %s54, %s55
      %p64 = scmp.eq.s32.totalorder %s23, 0
      %p65 = por %p63, %p64
      %p66 = scmp.ne.s32.totalorder %s54, %s55
      %p67 = scmp.eq.s32.totalorder %s24, 1
      %p68 = por %p66, %p67
      %p70 = scmp.ne.s32.totalorder %s55, %s69
      %p71 = scmp.eq.s32.totalorder %s24, 0
      %p72 = por %p70, %p71
      %s74 = sadd.s32 %s73, 1
      %p77 = scmp.eq.s32.totalorder %s18, 1
      %p78 = scmp.ne.s32.totalorder %s73, %s75
      %p79 = scmp.eq.s32.totalorder %s18, 0
      %p80 = por %p78, %p79
      %p81 = scmp.ne.s32.totalorder %s73, %s75
      %p82 = scmp.eq.s32.totalorder %s23, 1
      %p83 = por %p81, %p82
      %p84 = scmp.ne.s32.totalorder %s75, %s76
      %p85 = scmp.eq.s32.totalorder %s23, 0
      %p86 = por %p84, %p85
      %p87 = scmp.ne.s32.totalorder %s75, %s76
      %p88 = scmp.eq.s32.totalorder %s24, 1
      %p89 = por %p87, %p88
      %p91 = scmp.ne.s32.totalorder %s76, %s90
      %p92 = scmp.eq.s32.totalorder %s24, 0
      %p93 = por %p91, %p92
      %s95 = sadd.s32 %s94, 1
      %p98 = scmp.eq.s32.totalorder %s18, 1
      %p99 = scmp.ne.s32.totalorder %s94, %s96
      %p100 = scmp.eq.s32.totalorder %s18, 0
      %p101 = por %p99, %p100
      %p102 = scmp.ne.s32.totalorder %s94, %s96
      %p103 = scmp.eq.s32.totalorder %s23, 1
      %p104 = por %p102, %p103
      %p105 = scmp.ne.s32.totalorder %s96, %s97
      %p106 = scmp.eq.s32.totalorder %s23, 0
      %p107 = por %p105, %p106
      %p108 = scmp.ne.s32.totalorder %s96, %s97
      %p109 = scmp.eq.s32.totalorder %s24, 1
      %p110 = por %p108, %p109
      %p112 = scmp.ne.s32.totalorder %s97, %s111
      %p113 = scmp.eq.s32.totalorder %s24, 0
      %p114 = por %p112, %p113
      %s116 = sadd.s32 %s115, 1
      %p119 = scmp.eq.s32.totalorder %s18, 1
      %p120 = scmp.ne.s32.totalorder %s115, %s117
      %p121 = scmp.eq.s32.totalorder %s18, 0
      %p122 = por %p120, %p121
      %p123 = scmp.ne.s32.totalorder %s115, %s117
      %p124 = scmp.eq.s32.totalorder %s23, 1
      %p125 = por %p123, %p124
      %p126 = scmp.ne.s32.totalorder %s117, %s118
      %p127 = scmp.eq.s32.totalorder %s23, 0
      %p128 = por %p126, %p127
      %p129 = scmp.ne.s32.totalorder %s117, %s118
      %p130 = scmp.eq.s32.totalorder %s24, 1
      %p131 = por %p129, %p130
      %p133 = scmp.ne.s32.totalorder %s118, %s132
      %p134 = scmp.eq.s32.totalorder %s24, 0
      %p135 = por %p133, %p134
      %s136 = ssub.s32 %s18, %s25
      %p137 = scmp.eq.s32.totalorder %s136, 0
      %s139 = sadd.s32 %s138, 1
      %s140 = scalar_select %p137, %s138, %s139
      %p143 = pneg %p137
      %p144 = scmp.eq.s32.totalorder %s18, 1
      %p145 = por %p143, %p144
      %p146 = scmp.ne.s32.totalorder %s138, %s141
      %p147 = scmp.eq.s32.totalorder %s18, 0
      %p148 = por %p146, %p147
      %p149 = scmp.ne.s32.totalorder %s138, %s141
      %p150 = scmp.eq.s32.totalorder %s23, 1
      %p151 = por %p149, %p150
      %p152 = scmp.ne.s32.totalorder %s141, %s142
      %p153 = scmp.eq.s32.totalorder %s23, 0
      %p154 = por %p152, %p153
      %p155 = scmp.ne.s32.totalorder %s141, %s142
      %p156 = scmp.eq.s32.totalorder %s24, 1
      %p157 = por %p155, %p156
      %p159 = scmp.ne.s32.totalorder %s142, %s158
      %p160 = scmp.eq.s32.totalorder %s24, 0
      %p161 = por %p159, %p160
      %p162 = scmp.le.s32.totalorder 1, %s18
      %p163 = scmp.lt.s32.totalorder %s18, 3
      %p164 = pnand %p162, %p163
      %p165 = pneg %p164
      // Predicated region
      $region9: #{tpu_custom_call.1} parent=5 // pred_check
        _
      $region10: #{tpu_custom_call.1} parent=5 // pred_check_branch
        %167 = sbr.rel (%p164) target = $region12
      $region11: #{tpu_custom_call.1} parent=5 // pred_region
        %s168 = ssub.s32 %s18, 1
        // Predicated region
        $region13: #{tpu_custom_call.1} parent=11 // pred_check
          %p169 = pneg %p65
        $region14: #{tpu_custom_call.1} parent=11 // pred_check_branch
          %171 = sbr.rel (%p169) target = $region16
        $region15: #{tpu_custom_call.1} parent=11 // pred_region
          %s173 = ssub.s32 1024, 1024
          %174 = vsyncadd [#allocation6], %s173
          %s175 = sshll.u32 [#allocation5], 4
          %s176 = int_to_ptr.vmem [resolvable:$true] %s175
          %181 = dma.hbm_to_vmem [thread:$0]  %s1, 1024, %s176, [#allocation6], 64, 64, 4
        $region16: #{tpu_custom_call.1} parent=11 // pred_fallthru
          _
        // Predicated region
        $region17: #{tpu_custom_call.1} parent=11 // pred_check
          %p182 = pneg %p86
        $region18: #{tpu_custom_call.1} parent=11 // pred_check_branch
          %184 = sbr.rel (%p182) target = $region20
        $region19: #{tpu_custom_call.1} parent=11 // pred_region
          _
        $region20: #{tpu_custom_call.1} parent=11 // pred_fallthru
          _
        // Predicated region
        $region21: #{tpu_custom_call.1} parent=11 // pred_check
          %p185 = pneg %p107
        $region22: #{tpu_custom_call.1} parent=11 // pred_check_branch
          %187 = sbr.rel (%p185) target = $region24
        $region23: #{tpu_custom_call.1} parent=11 // pred_region
          %s189 = ssub.s32 2048, 2048
          %190 = vsyncadd [#allocation6], %s189
          %s191 = sshll.u32 [#allocation7], 4
          %s192 = int_to_ptr.vmem [resolvable:$true] %s191
          %197 = dma.hbm_to_vmem [thread:$0]  %s3, 2048, %s192, [#allocation6], 128, 128, 8
        $region24: #{tpu_custom_call.1} parent=11 // pred_fallthru
          _
        // Predicated region
        $region25: #{tpu_custom_call.1} parent=11 // pred_check
          %p198 = pneg %p128
        $region26: #{tpu_custom_call.1} parent=11 // pred_check_branch
          %200 = sbr.rel (%p198) target = $region28
        $region27: #{tpu_custom_call.1} parent=11 // pred_region
          _
        $region28: #{tpu_custom_call.1} parent=11 // pred_fallthru
          _
      $region12: #{tpu_custom_call.1} parent=5 // pred_fallthru
        _
      %p201 = scmp.lt.s32.totalorder %s18, 2
      // Predicated region
      $region29: #{tpu_custom_call.1} parent=5 // pred_check
        %p202 = pneg %p201
      $region30: #{tpu_custom_call.1} parent=5 // pred_check_branch
        %204 = sbr.rel (%p202) target = $region32
      $region31: #{tpu_custom_call.1} parent=5 // pred_region
        // Predicated region
        $region33: #{tpu_custom_call.1} parent=31 // pred_check
          %p205 = pneg %p38
        $region34: #{tpu_custom_call.1} parent=31 // pred_check_branch
          %207 = sbr.rel (%p205) target = $region36
        $region35: #{tpu_custom_call.1} parent=31 // pred_region
          %s208 = sand.u32 %s28, 1
          %s209 = scalar_lea.sflag [#allocation3], %s208
          %s210 = sand.u32 %s28, 1
          %s211 = smul.addr %s210, 128
          %s212 = scalar_lea.vmem [#allocation2], %s211
          %s213 = smul.u32 32, %s18
          %s215 = ssub.s32 2048, 2048
          %216 = vsyncadd %s209, %s215
          %s217 = smul.addr %s213, 64
          %s218 = scalar_lea.hbm %s0, %s217
          %s219 = sshll.u32 %s212, 4
          %s220 = int_to_ptr.vmem [resolvable:$true] %s219
          %225 = dma.hbm_to_vmem [thread:$0]  %s218, 2048, %s220, %s209, 64, 64, 4
        $region36: #{tpu_custom_call.1} parent=31 // pred_fallthru
          _
      $region32: #{tpu_custom_call.1} parent=5 // pred_fallthru
        _
      %p226 = scmp.le.s32.totalorder 1, %s18
      %p227 = scmp.lt.s32.totalorder %s18, 3
      %p228 = pnand %p226, %p227
      %p229 = pneg %p228
      // Predicated region
      $region37: #{tpu_custom_call.1} parent=5 // pred_check
        _
      $region38: #{tpu_custom_call.1} parent=5 // pred_check_branch
        %231 = sbr.rel (%p228) target = $region40
      $region39: #{tpu_custom_call.1} parent=5 // pred_region
        %s232 = ssub.s32 %s18, 1
        %s233 = sand.u32 %s31, 1
        %s234 = scalar_lea.sflag [#allocation3], %s233
        %s235 = sand.u32 %s31, 1
        %s236 = smul.addr %s235, 128
        %s237 = scalar_lea.vmem [#allocation2], %s236
        // Predicated region
        $region41: #{tpu_custom_call.1} parent=39 // pred_check
          %p238 = pneg %p44
        $region42: #{tpu_custom_call.1} parent=39 // pred_check_branch
          %240 = sbr.rel (%p238) target = $region44
        $region43: #{tpu_custom_call.1} parent=39 // pred_region
          %241 = dma.done %s234, 2048
        $region44: #{tpu_custom_call.1} parent=39 // pred_fallthru
          _
        // Predicated region
        $region45: #{tpu_custom_call.1} parent=39 // pred_check
          %p242 = pneg %p65
        $region46: #{tpu_custom_call.1} parent=39 // pred_check_branch
          %244 = sbr.rel (%p242) target = $region48
        $region47: #{tpu_custom_call.1} parent=39 // pred_region
          %245 = dma.done [#allocation6], 1024
        $region48: #{tpu_custom_call.1} parent=39 // pred_fallthru
          _
        // Predicated region
        $region49: #{tpu_custom_call.1} parent=39 // pred_check
          %p246 = pneg %p107
        $region50: #{tpu_custom_call.1} parent=39 // pred_check_branch
          %248 = sbr.rel (%p246) target = $region52
        $region51: #{tpu_custom_call.1} parent=39 // pred_region
          %249 = dma.done [#allocation6], 2048
        $region52: #{tpu_custom_call.1} parent=39 // pred_fallthru
          _
        %s250 = sand.u32 %s31, 1
        %s251 = scalar_lea.sflag [#allocation3], %s250
        %s252 = sand.u32 %s31, 1
        %s253 = smul.addr %s252, 128
        %s254 = scalar_lea.vmem [#allocation2], %s253
        %p255 = pneg %p44
        %p256 = pneg %p41
        %p257 = pneg %p65
        %p258 = pneg %p62
        %p259 = pneg %p86
        %p260 = pneg %p83
        %p261 = pneg %p107
        %p262 = pneg %p104
        %p263 = pneg %p128
        %p264 = pneg %p125
        %p265 = pneg %p154
        %p266 = pneg %p151
        %s267 = sand.u32 %s141, 1
        %s268 = scalar_lea.sflag [#allocation4], %s267
        %s269 = sand.u32 %s141, 1
        %s270 = scalar_lea.vmem [#allocation8], %s269
        %s271 = smul.u32 32, %s23
        %v273 = vld [vmem:[%s237] sm:$0xf]
        %v274 = vld [vmem:[%s237 + $0x4] sm:$0xf]
        %v275 = vld [vmem:[%s237 + $0x8] sm:$0xf]
        %v276 = vld [vmem:[%s237 + $0xc] sm:$0xf]
        %v277 = vld [vmem:[%s237 + $0x10] sm:$0xf]
        %v278 = vld [vmem:[%s237 + $0x14] sm:$0xf]
        %v279 = vld [vmem:[%s237 + $0x18] sm:$0xf]
        %v280 = vld [vmem:[%s237 + $0x1c] sm:$0xf]
        %v281 = vld [vmem:[%s237 + $0x20] sm:$0xf]
        %v282 = vld [vmem:[%s237 + $0x24] sm:$0xf]
        %v283 = vld [vmem:[%s237 + $0x28] sm:$0xf]
        %v284 = vld [vmem:[%s237 + $0x2c] sm:$0xf]
        %v285 = vld [vmem:[%s237 + $0x30] sm:$0xf]
        %v286 = vld [vmem:[%s237 + $0x34] sm:$0xf]
        %v287 = vld [vmem:[%s237 + $0x38] sm:$0xf]
        %v288 = vld [vmem:[%s237 + $0x3c] sm:$0xf]
        %v289 = vld [vmem:[%s237 + $0x40] sm:$0xf]
        %v290 = vld [vmem:[%s237 + $0x44] sm:$0xf]
        %v291 = vld [vmem:[%s237 + $0x48] sm:$0xf]
        %v292 = vld [vmem:[%s237 + $0x4c] sm:$0xf]
        %v293 = vld [vmem:[%s237 + $0x50] sm:$0xf]
        %v294 = vld [vmem:[%s237 + $0x54] sm:$0xf]
        %v295 = vld [vmem:[%s237 + $0x58] sm:$0xf]
        %v296 = vld [vmem:[%s237 + $0x5c] sm:$0xf]
        %v297 = vld [vmem:[%s237 + $0x60] sm:$0xf]
        %v298 = vld [vmem:[%s237 + $0x64] sm:$0xf]
        %v299 = vld [vmem:[%s237 + $0x68] sm:$0xf]
        %v300 = vld [vmem:[%s237 + $0x6c] sm:$0xf]
        %v301 = vld [vmem:[%s237 + $0x70] sm:$0xf]
        %v302 = vld [vmem:[%s237 + $0x74] sm:$0xf]
        %v303 = vld [vmem:[%s237 + $0x78] sm:$0xf]
        %v304 = vld [vmem:[%s237 + $0x7c] sm:$0xf]
        %v305 = vld [vmem:[#allocation5] sm:$0xf]
        %v306 = vld [vmem:[#allocation5 + $0x4] sm:$0xf]
        %v307 = vld [vmem:[#allocation5 + $0x8] sm:$0xf]
        %v308 = vld [vmem:[#allocation5 + $0xc] sm:$0xf]
        %v309 = vld [vmem:[#allocation5 + $0x10] sm:$0xf]
        %v310 = vld [vmem:[#allocation5 + $0x14] sm:$0xf]
        %v311 = vld [vmem:[#allocation5 + $0x18] sm:$0xf]
        %v312 = vld [vmem:[#allocation5 + $0x1c] sm:$0xf]
        %v313 = vld [vmem:[#allocation5 + $0x20] sm:$0xf]
        %v314 = vld [vmem:[#allocation5 + $0x24] sm:$0xf]
        %v315 = vld [vmem:[#allocation5 + $0x28] sm:$0xf]
        %v316 = vld [vmem:[#allocation5 + $0x2c] sm:$0xf]
        %v317 = vld [vmem:[#allocation5 + $0x30] sm:$0xf]
        %v318 = vld [vmem:[#allocation5 + $0x34] sm:$0xf]
        %v319 = vld [vmem:[#allocation5 + $0x38] sm:$0xf]
        %v320 = vld [vmem:[#allocation5 + $0x3c] sm:$0xf]
        %v321 = vld [vmem:[%s2] sm:$0x1]
        %v323 = vlaneseq
        %v324 = vshrl.u32 %v323, 7
        %v325 = vsub.s32 0, %v324
        %v326 = vrot.slane %v321, %v325
        %v360 = vunpack.c.l.b16 %v273
        %v361 = vunpack.c.l.b16 %v274
        %v362 = vunpack.c.l.b16 %v275
        %v363 = vunpack.c.l.b16 %v276
        %v364 = vunpack.c.l.b16 %v277
        %v365 = vunpack.c.l.b16 %v278
        %v366 = vunpack.c.l.b16 %v279
        %v367 = vunpack.c.l.b16 %v280
        %v368 = vunpack.c.l.b16 %v281
        %v369 = vunpack.c.l.b16 %v282
        %v370 = vunpack.c.l.b16 %v283
        %v371 = vunpack.c.l.b16 %v284
        %v372 = vunpack.c.l.b16 %v285
        %v373 = vunpack.c.l.b16 %v286
        %v374 = vunpack.c.l.b16 %v287
        %v375 = vunpack.c.l.b16 %v288
        %v376 = vunpack.c.l.b16 %v289
        %v377 = vunpack.c.l.b16 %v290
        %v378 = vunpack.c.l.b16 %v291
        %v379 = vunpack.c.l.b16 %v292
        %v380 = vunpack.c.l.b16 %v293
        %v381 = vunpack.c.l.b16 %v294
        %v382 = vunpack.c.l.b16 %v295
        %v383 = vunpack.c.l.b16 %v296
        %v384 = vunpack.c.l.b16 %v297
        %v385 = vunpack.c.l.b16 %v298
        %v386 = vunpack.c.l.b16 %v299
        %v387 = vunpack.c.l.b16 %v300
        %v388 = vunpack.c.l.b16 %v301
        %v389 = vunpack.c.l.b16 %v302
        %v390 = vunpack.c.l.b16 %v303
        %v391 = vunpack.c.l.b16 %v304
        %v392 = vpack.c.b16 %v361, %v360
        %v393 = vpack.c.b16 %v363, %v362
        %v394 = vpack.c.b16 %v365, %v364
        %v395 = vpack.c.b16 %v367, %v366
        %v396 = vpack.c.b16 %v369, %v368
        %v397 = vpack.c.b16 %v371, %v370
        %v398 = vpack.c.b16 %v373, %v372
        %v399 = vpack.c.b16 %v375, %v374
        %v400 = vpack.c.b16 %v377, %v376
        %v401 = vpack.c.b16 %v379, %v378
        %v402 = vpack.c.b16 %v381, %v380
        %v403 = vpack.c.b16 %v383, %v382
        %v404 = vpack.c.b16 %v385, %v384
        %v405 = vpack.c.b16 %v387, %v386
        %v406 = vpack.c.b16 %v389, %v388
        %v407 = vpack.c.b16 %v391, %v390
        %v440 = vunpack.c.l.b16 %v305
        %v441 = vunpack.c.l.b16 %v306
        %v442 = vunpack.c.l.b16 %v307
        %v443 = vunpack.c.l.b16 %v308
        %v444 = vunpack.c.l.b16 %v309
        %v445 = vunpack.c.l.b16 %v310
        %v446 = vunpack.c.l.b16 %v311
        %v447 = vunpack.c.l.b16 %v312
        %v448 = vunpack.c.l.b16 %v313
        %v449 = vunpack.c.l.b16 %v314
        %v450 = vunpack.c.l.b16 %v315
        %v451 = vunpack.c.l.b16 %v316
        %v452 = vunpack.c.l.b16 %v317
        %v453 = vunpack.c.l.b16 %v318
        %v454 = vunpack.c.l.b16 %v319
        %v455 = vunpack.c.l.b16 %v320
        %v456 = vpack.c.b16 %v441, %v440
        %v457 = vpack.c.b16 %v443, %v442
        %v458 = vpack.c.b16 %v445, %v444
        %v459 = vpack.c.b16 %v447, %v446
        %v460 = vpack.c.b16 %v449, %v448
        %v461 = vpack.c.b16 %v451, %v450
        %v462 = vpack.c.b16 %v453, %v452
        %v463 = vpack.c.b16 %v455, %v454
        %472 = vmatprep.subr.bf16.mxu0 0
        %473 = vmatpush1.bf16.msra.mxu0 %v463
        %474 = vmatprep.subr.bf16.mxu0 0
        %475 = vmatpush1.bf16.msra.mxu0 %v462
        %476 = vmatprep.subr.bf16.mxu0 0
        %477 = vmatpush1.bf16.msra.mxu0 %v461
        %478 = vmatprep.subr.bf16.mxu0 0
        %479 = vmatpush1.bf16.msra.mxu0 %v460
        %480 = vmatprep.subr.bf16.mxu0 0
        %481 = vmatpush1.bf16.msra.mxu0 %v459
        %482 = vmatprep.subr.bf16.mxu0 0
        %483 = vmatpush1.bf16.msra.mxu0 %v458
        %484 = vmatprep.subr.bf16.mxu0 0
        %485 = vmatpush1.bf16.msra.mxu0 %v457
        %486 = vmatprep.subr.bf16.mxu0 0
        %487 = vmatpush1.bf16.msra.mxu0 %v456
        %488 = vmatprep.subr.bf16.mxu0 0
        %489 = vmatpush2.bf16.msra.mxu0 0
        %490 = vmatprep.subr.bf16.mxu0 0
        %491 = vmatpush2.bf16.msra.mxu0 0
        %492 = vmatprep.subr.bf16.mxu0 0
        %493 = vmatpush2.bf16.msra.mxu0 0
        %494 = vmatprep.subr.bf16.mxu0 0
        %495 = vmatpush2.bf16.msra.mxu0 0
        %496 = vmatprep.subr.bf16.mxu0 0
        %497 = vmatpush2.bf16.msra.mxu0 0
        %498 = vmatprep.subr.bf16.mxu0 0
        %499 = vmatpush2.bf16.msra.mxu0 0
        %500 = vmatprep.subr.bf16.mxu0 0
        %501 = vmatpush2.bf16.msra.mxu0 0
        %502 = vmatprep.subr.bf16.mxu0 0
        %503 = vmatpush2.bf16.msra.mxu0 0
        %504 = vmatprep.mubr.bf16.mxu0 0
        %505 = vmatmul.mubr.bf16.gmra.mxu0 %v392
        %v506 = vpop.f32.mrf.mxu0
        %v507 = vadd.f32 %v326, %v506
        %v508 = vpop.f32.mrf.mxu0
        %v509 = vpop.f32.mrf.mxu0
        %v510 = vadd.f32 %v326, %v509
        %v511 = vpop.f32.mrf.mxu0
        %512 = vmatprep.mubr.bf16.mxu0 0
        %513 = vmatmul.mubr.bf16.gmra.mxu0 %v393
        %v514 = vpop.f32.mrf.mxu0
        %v515 = vadd.f32 %v326, %v514
        %v516 = vpop.f32.mrf.mxu0
        %v517 = vpop.f32.mrf.mxu0
        %v518 = vadd.f32 %v326, %v517
        %v519 = vpop.f32.mrf.mxu0
        %520 = vmatprep.mubr.bf16.mxu0 0
        %521 = vmatmul.mubr.bf16.gmra.mxu0 %v394
        %v522 = vpop.f32.mrf.mxu0
        %v523 = vadd.f32 %v326, %v522
        %v524 = vpop.f32.mrf.mxu0
        %v525 = vpop.f32.mrf.mxu0
        %v526 = vadd.f32 %v326, %v525
        %v527 = vpop.f32.mrf.mxu0
        %528 = vmatprep.mubr.bf16.mxu0 0
        %529 = vmatmul.mubr.bf16.gmra.mxu0 %v395
        %v530 = vpop.f32.mrf.mxu0
        %v531 = vadd.f32 %v326, %v530
        %v532 = vpop.f32.mrf.mxu0
        %v533 = vpop.f32.mrf.mxu0
        %v534 = vadd.f32 %v326, %v533
        %v535 = vpop.f32.mrf.mxu0
        %536 = vmatprep.mubr.bf16.mxu0 0
        %537 = vmatmul.mubr.bf16.gmra.mxu0 %v396
        %v538 = vpop.f32.mrf.mxu0
        %v539 = vadd.f32 %v326, %v538
        %v540 = vpop.f32.mrf.mxu0
        %v541 = vpop.f32.mrf.mxu0
        %v542 = vadd.f32 %v326, %v541
        %v543 = vpop.f32.mrf.mxu0
        %544 = vmatprep.mubr.bf16.mxu0 0
        %545 = vmatmul.mubr.bf16.gmra.mxu0 %v397
        %v546 = vpop.f32.mrf.mxu0
        %v547 = vadd.f32 %v326, %v546
        %v548 = vpop.f32.mrf.mxu0
        %v549 = vpop.f32.mrf.mxu0
        %v550 = vadd.f32 %v326, %v549
        %v551 = vpop.f32.mrf.mxu0
        %552 = vmatprep.mubr.bf16.mxu0 0
        %553 = vmatmul.mubr.bf16.gmra.mxu0 %v398
        %v554 = vpop.f32.mrf.mxu0
        %v555 = vadd.f32 %v326, %v554
        %v556 = vpop.f32.mrf.mxu0
        %v557 = vpop.f32.mrf.mxu0
        %v558 = vadd.f32 %v326, %v557
        %v559 = vpop.f32.mrf.mxu0
        %560 = vmatprep.mubr.bf16.mxu0 0
        %561 = vmatmul.mubr.bf16.gmra.mxu0 %v399
        %v562 = vpop.f32.mrf.mxu0
        %v563 = vadd.f32 %v326, %v562
        %v564 = vpop.f32.mrf.mxu0
        %v565 = vpop.f32.mrf.mxu0
        %v566 = vadd.f32 %v326, %v565
        %v567 = vpop.f32.mrf.mxu0
        %568 = vmatprep.mubr.bf16.mxu0 0
        %569 = vmatmul.mubr.bf16.gmra.mxu0 %v400
        %v570 = vpop.f32.mrf.mxu0
        %v571 = vadd.f32 %v326, %v570
        %v572 = vpop.f32.mrf.mxu0
        %v573 = vpop.f32.mrf.mxu0
        %v574 = vadd.f32 %v326, %v573
        %v575 = vpop.f32.mrf.mxu0
        %576 = vmatprep.mubr.bf16.mxu0 0
        %577 = vmatmul.mubr.bf16.gmra.mxu0 %v401
        %v578 = vpop.f32.mrf.mxu0
        %v579 = vadd.f32 %v326, %v578
        %v580 = vpop.f32.mrf.mxu0
        %v581 = vpop.f32.mrf.mxu0
        %v582 = vadd.f32 %v326, %v581
        %v583 = vpop.f32.mrf.mxu0
        %584 = vmatprep.mubr.bf16.mxu0 0
        %585 = vmatmul.mubr.bf16.gmra.mxu0 %v402
        %v586 = vpop.f32.mrf.mxu0
        %v587 = vadd.f32 %v326, %v586
        %v588 = vpop.f32.mrf.mxu0
        %v589 = vpop.f32.mrf.mxu0
        %v590 = vadd.f32 %v326, %v589
        %v591 = vpop.f32.mrf.mxu0
        %592 = vmatprep.mubr.bf16.mxu0 0
        %593 = vmatmul.mubr.bf16.gmra.mxu0 %v403
        %v594 = vpop.f32.mrf.mxu0
        %v595 = vadd.f32 %v326, %v594
        %v596 = vpop.f32.mrf.mxu0
        %v597 = vpop.f32.mrf.mxu0
        %v598 = vadd.f32 %v326, %v597
        %v599 = vpop.f32.mrf.mxu0
        %600 = vmatprep.mubr.bf16.mxu0 0
        %601 = vmatmul.mubr.bf16.gmra.mxu0 %v404
        %v602 = vpop.f32.mrf.mxu0
        %v603 = vadd.f32 %v326, %v602
        %v604 = vpop.f32.mrf.mxu0
        %v605 = vpop.f32.mrf.mxu0
        %v606 = vadd.f32 %v326, %v605
        %v607 = vpop.f32.mrf.mxu0
        %608 = vmatprep.mubr.bf16.mxu0 0
        %609 = vmatmul.mubr.bf16.gmra.mxu0 %v405
        %v610 = vpop.f32.mrf.mxu0
        %v611 = vadd.f32 %v326, %v610
        %v612 = vpop.f32.mrf.mxu0
        %v613 = vpop.f32.mrf.mxu0
        %v614 = vadd.f32 %v326, %v613
        %v615 = vpop.f32.mrf.mxu0
        %616 = vmatprep.mubr.bf16.mxu0 0
        %617 = vmatmul.mubr.bf16.gmra.mxu0 %v406
        %v618 = vpop.f32.mrf.mxu0
        %v619 = vadd.f32 %v326, %v618
        %v620 = vpop.f32.mrf.mxu0
        %v621 = vpop.f32.mrf.mxu0
        %v622 = vadd.f32 %v326, %v621
        %v623 = vpop.f32.mrf.mxu0
        %624 = vmatprep.mubr.bf16.mxu0 0
        %625 = vmatmul.mubr.bf16.gmra.mxu0 %v407
        %v626 = vpop.f32.mrf.mxu0
        %v627 = vadd.f32 %v326, %v626
        %v628 = vpop.f32.mrf.mxu0
        %v629 = vpop.f32.mrf.mxu0
        %v630 = vadd.f32 %v326, %v629
        %v631 = vpop.f32.mrf.mxu0
        %632 = vdwg.mxu0
        %v633 = vmax.f32 %v507, 0.0
        %v634 = vmax.f32 %v510, 0.0
        %v635 = vmax.f32 %v515, 0.0
        %v636 = vmax.f32 %v518, 0.0
        %v637 = vmax.f32 %v523, 0.0
        %v638 = vmax.f32 %v526, 0.0
        %v639 = vmax.f32 %v531, 0.0
        %v640 = vmax.f32 %v534, 0.0
        %v641 = vmax.f32 %v539, 0.0
        %v642 = vmax.f32 %v542, 0.0
        %v643 = vmax.f32 %v547, 0.0
        %v644 = vmax.f32 %v550, 0.0
        %v645 = vmax.f32 %v555, 0.0
        %v646 = vmax.f32 %v558, 0.0
        %v647 = vmax.f32 %v563, 0.0
        %v648 = vmax.f32 %v566, 0.0
        %v649 = vmax.f32 %v571, 0.0
        %v650 = vmax.f32 %v574, 0.0
        %v651 = vmax.f32 %v579, 0.0
        %v652 = vmax.f32 %v582, 0.0
        %v653 = vmax.f32 %v587, 0.0
        %v654 = vmax.f32 %v590, 0.0
        %v655 = vmax.f32 %v595, 0.0
        %v656 = vmax.f32 %v598, 0.0
        %v657 = vmax.f32 %v603, 0.0
        %v658 = vmax.f32 %v606, 0.0
        %v659 = vmax.f32 %v611, 0.0
        %v660 = vmax.f32 %v614, 0.0
        %v661 = vmax.f32 %v619, 0.0
        %v662 = vmax.f32 %v622, 0.0
        %v663 = vmax.f32 %v627, 0.0
        %v664 = vmax.f32 %v630, 0.0
        %665 = vmatprep.subr.mxu0 0.0
        %666 = vmatpush1.msra.mxu0 %v648
        %667 = vmatprep.subr.mxu0 0.0
        %668 = vmatpush1.msra.mxu0 %v647
        %669 = vmatprep.subr.mxu0 0.0
        %670 = vmatpush1.msra.mxu0 %v646
        %671 = vmatprep.subr.mxu0 0.0
        %672 = vmatpush1.msra.mxu0 %v645
        %673 = vmatprep.subr.mxu0 0.0
        %674 = vmatpush1.msra.mxu0 %v644
        %675 = vmatprep.subr.mxu0 0.0
        %676 = vmatpush1.msra.mxu0 %v643
        %677 = vmatprep.subr.mxu0 0.0
        %678 = vmatpush1.msra.mxu0 %v642
        %679 = vmatprep.subr.mxu0 0.0
        %680 = vmatpush1.msra.mxu0 %v641
        %681 = vmatprep.subr.mxu0 0.0
        %682 = vmatpush1.msra.mxu0 %v640
        %683 = vmatprep.subr.mxu0 0.0
        %684 = vmatpush1.msra.mxu0 %v639
        %685 = vmatprep.subr.mxu0 0.0
        %686 = vmatpush1.msra.mxu0 %v638
        %687 = vmatprep.subr.mxu0 0.0
        %688 = vmatpush1.msra.mxu0 %v637
        %689 = vmatprep.subr.mxu0 0.0
        %690 = vmatpush1.msra.mxu0 %v636
        %691 = vmatprep.subr.mxu0 0.0
        %692 = vmatpush1.msra.mxu0 %v635
        %693 = vmatprep.subr.mxu0 0.0
        %694 = vmatpush1.msra.mxu0 %v634
        %695 = vmatprep.subr.mxu0 0.0
        %696 = vmatpush1.msra.mxu0 %v633
        %697 = vmatprep.subr.mxu0 0.0
        %698 = vmatpush2.msra.mxu0 %v664
        %699 = vmatprep.subr.mxu0 0.0
        %700 = vmatpush2.msra.mxu0 %v663
        %701 = vmatprep.subr.mxu0 0.0
        %702 = vmatpush2.msra.mxu0 %v662
        %703 = vmatprep.subr.mxu0 0.0
        %704 = vmatpush2.msra.mxu0 %v661
        %705 = vmatprep.subr.mxu0 0.0
        %706 = vmatpush2.msra.mxu0 %v660
        %707 = vmatprep.subr.mxu0 0.0
        %708 = vmatpush2.msra.mxu0 %v659
        %709 = vmatprep.subr.mxu0 0.0
        %710 = vmatpush2.msra.mxu0 %v658
        %711 = vmatprep.subr.mxu0 0.0
        %712 = vmatpush2.msra.mxu0 %v657
        %713 = vmatprep.subr.mxu0 0.0
        %714 = vmatpush2.msra.mxu0 %v656
        %715 = vmatprep.subr.mxu0 0.0
        %716 = vmatpush2.msra.mxu0 %v655
        %717 = vmatprep.subr.mxu0 0.0
        %718 = vmatpush2.msra.mxu0 %v654
        %719 = vmatprep.subr.mxu0 0.0
        %720 = vmatpush2.msra.mxu0 %v653
        %721 = vmatprep.subr.mxu0 0.0
        %722 = vmatpush2.msra.mxu0 %v652
        %723 = vmatprep.subr.mxu0 0.0
        %724 = vmatpush2.msra.mxu0 %v651
        %725 = vmatprep.subr.mxu0 0.0
        %726 = vmatpush2.msra.mxu0 %v650
        %727 = vmatprep.subr.mxu0 0.0
        %728 = vmatpush2.msra.mxu0 %v649
        %729 = vmatprep.mubr.f32.mxu0 0.00390625
        %730 = vmatmul.mubr.f32.gmra.mxu0 0.00390625
        %v731 = vpop.f32.mrf.mxu0
        %v732 = vadd.f32 0.0, %v731
        %v733 = vpop.f32.mrf.mxu0
        %734 = vdwg.mxu0
        %v735 = vld [vmem:[#allocation7] sm:$0xff]
        %v736 = vld [vmem:[#allocation7 + $0x8] sm:$0xff]
        %v737 = vld [vmem:[#allocation7 + $0x10] sm:$0xff]
        %v738 = vld [vmem:[#allocation7 + $0x18] sm:$0xff]
        %v739 = vld [vmem:[#allocation7 + $0x20] sm:$0xff]
        %v740 = vld [vmem:[#allocation7 + $0x28] sm:$0xff]
        %v741 = vld [vmem:[#allocation7 + $0x30] sm:$0xff]
        %v742 = vld [vmem:[#allocation7 + $0x38] sm:$0xff]
        %v743 = vld [vmem:[#allocation7 + $0x40] sm:$0xff]
        %v744 = vld [vmem:[#allocation7 + $0x48] sm:$0xff]
        %v745 = vld [vmem:[#allocation7 + $0x50] sm:$0xff]
        %v746 = vld [vmem:[#allocation7 + $0x58] sm:$0xff]
        %v747 = vld [vmem:[#allocation7 + $0x60] sm:$0xff]
        %v748 = vld [vmem:[#allocation7 + $0x68] sm:$0xff]
        %v749 = vld [vmem:[#allocation7 + $0x70] sm:$0xff]
        %v750 = vld [vmem:[#allocation7 + $0x78] sm:$0xff]
        %v751 = vld [vmem:[%s4] sm:$0x1]
        %752 = vmatprep.subr.mxu0 0.0
        %753 = vmatpush1.msra.mxu0 %v750
        %754 = vmatprep.subr.mxu0 0.0
        %755 = vmatpush1.msra.mxu0 %v749
        %756 = vmatprep.subr.mxu0 0.0
        %757 = vmatpush1.msra.mxu0 %v748
        %758 = vmatprep.subr.mxu0 0.0
        %759 = vmatpush1.msra.mxu0 %v747
        %760 = vmatprep.subr.mxu0 0.0
        %761 = vmatpush1.msra.mxu0 %v746
        %762 = vmatprep.subr.mxu0 0.0
        %763 = vmatpush1.msra.mxu0 %v745
        %764 = vmatprep.subr.mxu0 0.0
        %765 = vmatpush1.msra.mxu0 %v744
        %766 = vmatprep.subr.mxu0 0.0
        %767 = vmatpush1.msra.mxu0 %v743
        %768 = vmatprep.subr.mxu0 0.0
        %769 = vmatpush1.msra.mxu0 %v742
        %770 = vmatprep.subr.mxu0 0.0
        %771 = vmatpush1.msra.mxu0 %v741
        %772 = vmatprep.subr.mxu0 0.0
        %773 = vmatpush1.msra.mxu0 %v740
        %774 = vmatprep.subr.mxu0 0.0
        %775 = vmatpush1.msra.mxu0 %v739
        %776 = vmatprep.subr.mxu0 0.0
        %777 = vmatpush1.msra.mxu0 %v738
        %778 = vmatprep.subr.mxu0 0.0
        %779 = vmatpush1.msra.mxu0 %v737
        %780 = vmatprep.subr.mxu0 0.0
        %781 = vmatpush1.msra.mxu0 %v736
        %782 = vmatprep.subr.mxu0 0.0
        %783 = vmatpush1.msra.mxu0 %v735
        %784 = vmatprep.subr.mxu0 0.0
        %785 = vmatpush2.msra.mxu0 0.0
        %786 = vmatprep.subr.mxu0 0.0
        %787 = vmatpush2.msra.mxu0 0.0
        %788 = vmatprep.subr.mxu0 0.0
        %789 = vmatpush2.msra.mxu0 0.0
        %790 = vmatprep.subr.mxu0 0.0
        %791 = vmatpush2.msra.mxu0 0.0
        %792 = vmatprep.subr.mxu0 0.0
        %793 = vmatpush2.msra.mxu0 0.0
        %794 = vmatprep.subr.mxu0 0.0
        %795 = vmatpush2.msra.mxu0 0.0
        %796 = vmatprep.subr.mxu0 0.0
        %797 = vmatpush2.msra.mxu0 0.0
        %798 = vmatprep.subr.mxu0 0.0
        %799 = vmatpush2.msra.mxu0 0.0
        %800 = vmatprep.subr.mxu0 0.0
        %801 = vmatpush2.msra.mxu0 0.0
        %802 = vmatprep.subr.mxu0 0.0
        %803 = vmatpush2.msra.mxu0 0.0
        %804 = vmatprep.subr.mxu0 0.0
        %805 = vmatpush2.msra.mxu0 0.0
        %806 = vmatprep.subr.mxu0 0.0
        %807 = vmatpush2.msra.mxu0 0.0
        %808 = vmatprep.subr.mxu0 0.0
        %809 = vmatpush2.msra.mxu0 0.0
        %810 = vmatprep.subr.mxu0 0.0
        %811 = vmatpush2.msra.mxu0 0.0
        %812 = vmatprep.subr.mxu0 0.0
        %813 = vmatpush2.msra.mxu0 0.0
        %814 = vmatprep.subr.mxu0 0.0
        %815 = vmatpush2.msra.mxu0 0.0
        %816 = vmatprep.mubr.f32.mxu0 0.0
        %817 = vmatmul.mubr.f32.gmra.mxu0 %v732
        %v818 = vpop.f32.mrf.mxu0
        %v819 = vadd.f32 %v751, %v818
        %v820 = vpop.f32.mrf.mxu0
        %821 = vdwg.mxu0
        %822 = vst [vmem:[%s270] sm:$0x1] %v819
        %s823 = sand.u32 %s141, 1
        %s824 = scalar_lea.sflag [#allocation4], %s823
        %s825 = sand.u32 %s141, 1
        %s826 = scalar_lea.vmem [#allocation8], %s825
        // Predicated region
        $region53: #{tpu_custom_call.1} parent=39 // pred_check
          %p827 = pneg %p151
        $region54: #{tpu_custom_call.1} parent=39 // pred_check_branch
          %829 = sbr.rel (%p827) target = $region56
        $region55: #{tpu_custom_call.1} parent=39 // pred_region
          %s831 = ssub.s32 16, 16
          %832 = vsyncadd %s824, %s831
          %s833 = smul.addr %s23, 16
          %s834 = scalar_lea.hbm %s5, %s833
          %s836 = sshll.u32 %s826, 4
          %s837 = int_to_ptr.vmem [resolvable:$true] %s836
          %839 = dma.vmem_to_hbm [thread:$0]  %s837, 16, %s834, %s824
        $region56: #{tpu_custom_call.1} parent=39 // pred_fallthru
          _
      $region40: #{tpu_custom_call.1} parent=5 // pred_fallthru
        _
      %p840 = scmp.le.s32.totalorder 2, %s18
      // Predicated region
      $region57: #{tpu_custom_call.1} parent=5 // pred_check
        %p841 = pneg %p840
      $region58: #{tpu_custom_call.1} parent=5 // pred_check_branch
        %843 = sbr.rel (%p841) target = $region60
      $region59: #{tpu_custom_call.1} parent=5 // pred_region
        %s844 = ssub.s32 %s18, 2
        // Predicated region
        $region61: #{tpu_custom_call.1} parent=59 // pred_check
          %p845 = pneg %p157
        $region62: #{tpu_custom_call.1} parent=59 // pred_check_branch
          %847 = sbr.rel (%p845) target = $region64
        $region63: #{tpu_custom_call.1} parent=59 // pred_region
          %s848 = sand.u32 %s142, 1
          %s849 = scalar_lea.sflag [#allocation4], %s848
          %s850 = sand.u32 %s142, 1
          %s851 = scalar_lea.vmem [#allocation8], %s850
          %852 = dma.done %s849, 16
        $region64: #{tpu_custom_call.1} parent=59 // pred_fallthru
          _
      $region60: #{tpu_custom_call.1} parent=5 // pred_fallthru
        _
    $region6: #{tpu_custom_call.1} parent=1 // loop_footer
      %s22 = sadd.s32 1, %s18
    $region7: #{tpu_custom_call.1} parent=1 // loop_footer_branch
      %17 = sbr.rel target = $region3
    $region8: #{tpu_custom_call.1} parent=1 // loop_exit
      _
    %853 = vsyncpa [#allocation3], 1
    %s854 = scalar_lea.sflag [#allocation3], 1
    %855 = vsyncpa %s854, 1
    %856 = vsyncpa [#allocation6], 1
    %857 = vsyncpa [#allocation4], 1
    %s858 = scalar_lea.sflag [#allocation4], 1
    %859 = vsyncpa %s858, 1

</llo_original>
